<compile_context>
chip_gen: v7x
topology: tpu7x:2x2x1
jax: 0.10.0
libtpu: 0.0.40
codegen_flags: <defaults>
</compile_context>

<pallas_src>
import functools
import math

import jax
import jax.numpy as jnp
import numpy as np
from jax import lax
from jax.experimental import pallas as pl
from jax.experimental.pallas import tpu as pltpu

_LANE = 128
_TARGET_BLOCK_BYTES = 2 * 1024 * 1024   # ~2 MiB per input stream per block
_MIN_PALLAS_ELEMS = 1 << 14             # below this, plain XLA is faster


def _cdiv(a, b):
    return -(-a // b)


def _round_up(x, m):
    return _cdiv(x, m) * m


def _logit(t):
    if t <= 0.0:
        return -float("inf")
    if t >= 1.0:
        return float("inf")
    return math.log(t / (1.0 - t))


def _finalize(tp, fp):
    count = tp + fp
    # Fresh buffers: total = TP, count = TP + FP only if count > 0, else 0/0 -> NaN.
    total_buf = jnp.where(count > 0, tp, 0.0)
    count_buf = jnp.where(count > 0, count, 0.0)
    return (total_buf / count_buf).reshape((1,)).astype(jnp.float32)


def _precision_kernel(ignore_idx, p0_const, use_w, mask_specs, *refs):
    """Streaming weighted TP / FP reduction over one (2-D or 3-D) tile.

    refs = labels, p1, [p0 (only if p0_const is None)], [w], tp_out, fp_out
    Static config:
      ignore_idx : int, used only when use_w is False.
      p0_const   : None -> read p0 stream; float -> compare p1 > p0_const.
      mask_specs : tuple of (tile_axis, grid_axis, block_len, limit) — validity
                   masks for partially-filled edge blocks (folded into weights).
    """
    idx = 0
    labels_ref = refs[idx]; idx += 1
    p1_ref = refs[idx]; idx += 1
    if p0_const is None:
        p0_ref = refs[idx]; idx += 1
    if use_w:
        w_ref = refs[idx]; idx += 1
    tp_ref, fp_ref = refs[idx], refs[idx + 1]

    j = pl.program_id(1)

    @pl.when(j == 0)
    def _():
        tp_ref[...] = jnp.zeros_like(tp_ref)
        fp_ref[...] = jnp.zeros_like(fp_ref)

    labels = labels_ref[...]
    p1 = p1_ref[...]
    if p0_const is None:
        pred_true = p1 > p0_ref[...]
    else:
        pred_true = p1 > p0_const          # sigmoid(x) > t  <=>  x > logit(t)

    if use_w:
        w = w_ref[...]
    else:
        w = jnp.where(labels != ignore_idx, 1.0, 0.0)

    # Zero the weights of out-of-range / garbage elements in edge blocks so they
    # contribute to neither TP nor FP.
    for (tile_axis, grid_axis, block_len, limit) in mask_specs:
        pos = (lax.broadcasted_iota(jnp.int32, labels.shape, tile_axis)
               + pl.program_id(grid_axis) * block_len)
        w = jnp.where(pos < limit, w, 0.0)

    g = jnp.where(pred_true, w, 0.0)            # shared factor w * [pred > 0]
    tp = jnp.sum(jnp.where(labels > 0, g, 0.0))
    fp = jnp.sum(jnp.where(labels == 0, g, 0.0))

    tp_ref[...] = tp_ref[...] + tp
    fp_ref[...] = fp_ref[...] + fp


def precision_forward(labels, preds, weights=None, *, dim=1, ignore_idx=-1,
                      threshold=0.5, target_block_bytes=_TARGET_BLOCK_BYTES,
                      min_pallas_elems=_MIN_PALLAS_ELEMS):
    """Returns the metric value (shape (1,) float32), like Precision().forward()."""
    C = preds.shape[dim]
    assert C in (1, 2), "precision only support 2 class"

    N = labels.shape[0]
    P = int(np.prod(labels.shape[1:])) if labels.ndim > 1 else 1

    labels2 = labels.reshape(N, P)
    if labels2.dtype != jnp.int32:
        labels2 = labels2.astype(jnp.int32)

    preds_nc = preds if dim == 1 else jnp.moveaxis(preds, dim, 1)
    if preds_nc.dtype != jnp.float32:
        preds_nc = preds_nc.astype(jnp.float32)
    preds3 = preds_nc.reshape(N, C, P)          # free reshape (row-major)

    use_w = weights is not None
    w2 = weights.reshape(N, P).astype(jnp.float32) if use_w else None

    # ---------------- small-input fast path (plain fused XLA) ----------------
    if N * P < min_pallas_elems:
        if C == 1:
            pred_true = preds3[:, 0, :] > _logit(threshold)
        else:
            pred_true = preds3[:, 1, :] > preds3[:, 0, :]
        w = w2 if use_w else (labels2 != ignore_idx).astype(jnp.float32)
        tp = jnp.sum(jnp.where((labels2 > 0) & pred_true, w, 0.0))
        fp = jnp.sum(jnp.where((labels2 == 0) & pred_true, w, 0.0))
        return _finalize(tp, fp)

    # ---------------------------- Pallas path --------------------------------
    R = (P // _LANE) if (P % _LANE == 0) else 0
    mask_specs = []

    if R >= 8:
        # ---- Layout A: per-batch (R, 128) planes, full vreg utilization -----
        rows_budget = max(8, (target_block_bytes // (_LANE * 4)) // 8 * 8)
        if R >= rows_budget:
            nb, rb = 1, rows_budget                       # rb multiple of 8
        else:
            nb = min(N, max(1, rows_budget // _round_up(R, 8)))
            rb = R                                        # rb == full dim
        gi, gj = _cdiv(N, nb), _cdiv(R, rb)
        if N % nb:
            mask_specs.append((0, 0, nb, N))
        if R % rb:
            mask_specs.append((1, 1, rb, R))

        plane_spec = pl.BlockSpec((nb, rb, _LANE), lambda i, j: (i, j, 0))
        labels_v = labels2.reshape(N, R, _LANE)
        in_specs = [plane_spec]
        args = [labels_v]
        if C == 2:
            preds_v = preds3.reshape(N, C, R, _LANE)      # free reshape
            in_specs.append(
                pl.BlockSpec((nb, None, rb, _LANE), lambda i, j: (i, 1, j, 0)))
            in_specs.append(
                pl.BlockSpec((nb, None, rb, _LANE), lambda i, j: (i, 0, j, 0)))
            args += [preds_v, preds_v]
            p0_const = None
            pred_bytes = 2 * N * P * 4
        else:
            in_specs.append(plane_spec)
            args.append(preds3.reshape(N, R, _LANE))
            p0_const = _logit(threshold)
            pred_bytes = N * P * 4
        if use_w:
            in_specs.append(plane_spec)
            args.append(w2.reshape(N, R, _LANE))
    else:
        # ---- Layout B: (N, P) rows-as-sublanes, large lane chunks ------------
        nb = min(N, 4096)                                 # 4096 % 8 == 0
        gi = _cdiv(N, nb)
        if N % nb:
            mask_specs.append((0, 0, nb, N))
        padded_rows = _round_up(nb, 8)
        lb = max(_LANE, (target_block_bytes // (padded_rows * 4)) // _LANE * _LANE)
        if lb >= P:
            lb, gj = P, 1                                 # block == full dim
        else:
            gj = _cdiv(P, lb)
            if P % lb:
                mask_specs.append((1, 1, lb, P))

        row_spec = pl.BlockSpec((nb, lb), lambda i, j: (i, j))
        in_specs = [row_spec, row_spec]
        if C == 2:
            # One fused XLA pass instead of two full-size jnp.take copies.
            # (p1 - p0) > 0 matches (p1 > p0) except a denormal-difference corner.
            score = preds3[:, 1, :] - preds3[:, 0, :]
            p0_const = 0.0
        else:
            score = preds3[:, 0, :]
            p0_const = _logit(threshold)
        args = [labels2, score]
        pred_bytes = N * P * 4
        if use_w:
            in_specs.append(row_spec)
            args.append(w2)

    grid = (gi, gj)
    out_block = pl.BlockSpec((1, 1, 1), lambda i, j: (i, 0, 0))
    kernel = functools.partial(_precision_kernel, ignore_idx, p0_const, use_w,
                               tuple(mask_specs))

    bytes_accessed = (N * P * 4                    # labels
                      + pred_bytes                 # prediction stream(s)
                      + (N * P * 4 if use_w else 0)
                      + gi * 8)                    # tp/fp partials
    cost = pl.CostEstimate(flops=12 * N * P, transcendentals=0,
                           bytes_accessed=bytes_accessed)

    tp_parts, fp_parts = pl.pallas_call(
        kernel,
        out_shape=(jax.ShapeDtypeStruct((gi, 1, 1), jnp.float32),
                   jax.ShapeDtypeStruct((gi, 1, 1), jnp.float32)),
        grid_spec=pltpu.PrefetchScalarGridSpec(
            num_scalar_prefetch=0,
            grid=grid,
            in_specs=in_specs,
            out_specs=(out_block, out_block),
        ),
        compiler_params=pltpu.CompilerParams(
            dimension_semantics=("parallel", "arbitrary"),
            vmem_limit_bytes=32 * 1024 * 1024,
        ),
        cost_estimate=cost,
    )(*args)

    return _finalize(jnp.sum(tp_parts), jnp.sum(fp_parts))


def _precision_ref(labels, preds, weights=None, dim=1, ignore_idx=-1,
                   threshold=0.5):
    """Pure-JAX reference of the same forward pass."""
    if preds.shape[dim] == 1:
        pred_labels = (jax.nn.sigmoid(preds) > threshold).astype(jnp.int32)
        pred_labels = jnp.squeeze(pred_labels, axis=dim)
    else:
        pred_labels = jnp.argmax(preds, axis=dim)
    N = labels.shape[0]
    P = int(np.prod(labels.shape[1:])) if labels.ndim > 1 else 1
    labels = labels.reshape(N, P)
    pred_labels = pred_labels.reshape(N, P)
    if weights is None:
        w = (labels != ignore_idx).astype(jnp.float32)
    else:
        w = weights.reshape(N, P).astype(jnp.float32)
    tp = jnp.sum(w * ((labels > 0) & (pred_labels > 0)).astype(jnp.float32))
    fp = jnp.sum(w * ((labels == 0) & (pred_labels > 0)).astype(jnp.float32))
    count = tp + fp
    return jnp.where(count > 0, tp, 0.0) / jnp.where(count > 0, count, 0.0)


if __name__ == "__main__":
    key = jax.random.PRNGKey(0)

    def make_inputs(k, n, c, h, w):
        k1, k2, k3 = jax.random.split(k, 3)
        lab = jax.random.randint(k1, (n, h, w), minval=-1, maxval=2,
                                 dtype=jnp.int32)      # {-1, 0, 1}; -1 = ignore
        prd = jax.random.normal(k2, (n, c, h, w), dtype=jnp.float32)
        wts = jax.random.uniform(k3, (n, h, w), dtype=jnp.float32)
        return lab, prd, wts

    def check(got, want):
        np.testing.assert_allclose(np.asarray(got)[0], np.asarray(want),
                                   rtol=1e-5, atol=1e-6)

    keys = jax.random.split(key, 8)

    # 1) tiny 2-class, layout B single block (force Pallas path).
    lab, prd, _ = make_inputs(keys[0], 2, 2, 16, 16)
    check(jax.block_until_ready(precision_forward(lab, prd, min_pallas_elems=0)),
          _precision_ref(lab, prd))

    # 2) layout A (P % 128 == 0, R = 16).
    lab, prd, wts = make_inputs(keys[1], 2, 2, 32, 64)
    check(jax.block_until_ready(precision_forward(lab, prd, min_pallas_elems=0)),
          _precision_ref(lab, prd))

    # 3) layout A with a partial row-block (R = 12, rb = 8 -> row mask).
    lab3, prd3, _ = make_inputs(keys[2], 2, 2, 24, 64)
    check(jax.block_until_ready(
        precision_forward(lab3, prd3, min_pallas_elems=0,
                          target_block_bytes=4096)),
          _precision_ref(lab3, prd3))

    # 4) layout A with multi-batch blocks and a partial batch-block (N=6, nb=4).
    lab4, prd4, _ = make_inputs(keys[3], 6, 2, 16, 64)
    check(jax.block_until_ready(
        precision_forward(lab4, prd4, min_pallas_elems=0,
                          target_block_bytes=16384)),
          _precision_ref(lab4, prd4))

    # 5) layout B with non-128-multiple P and partial lane chunks (P = 391).
    lab5, prd5, _ = make_inputs(keys[4], 2, 2, 17, 23)
    check(jax.block_until_ready(
        precision_forward(lab5, prd5, min_pallas_elems=0,
                          target_block_bytes=4096)),
          _precision_ref(lab5, prd5))

    # 6) single-channel sigmoid/threshold path (layout A, constant threshold).
    lab6, prd6, _ = make_inputs(keys[5], 2, 1, 32, 64)
    check(jax.block_until_ready(precision_forward(lab6, prd6, min_pallas_elems=0)),
          _precision_ref(lab6, prd6))

    # 7) external weights path.
    check(jax.block_until_ready(
        precision_forward(lab, prd, weights=wts, min_pallas_elems=0)),
          _precision_ref(lab, prd, weights=wts))

    # 8) default call on a tiny input exercises the XLA fast path.
    check(jax.block_until_ready(precision_forward(lab, prd)),
          _precision_ref(lab, prd))

    print("KERNEL_OK")
</pallas_src>

<mosaic_0001>
module attributes {stable_mosaic.version = 11 : i64} {
  func.func @_precision_kernel(%arg0: i32, %arg1: i32, %arg2: memref<2x256xi32, #tpu.memory_space<vmem>>, %arg3: memref<2x256xf32, #tpu.memory_space<vmem>>, %arg4: memref<1x1x1xf32, #tpu.memory_space<vmem>>, %arg5: memref<1x1x1xf32, #tpu.memory_space<vmem>>) attributes {dimension_semantics = [#tpu.dimension_semantics<parallel>, #tpu.dimension_semantics<arbitrary>], iteration_bounds = array<i64: 1, 1>, scalar_prefetch = 0 : i64, scratch_operands = 0 : i64, tpu.core_type = #tpu.core_type<tc>, window_params = [{transform_indices = @transform_0, window_bounds = array<i64: 2, 256>}, {transform_indices = @transform_1, window_bounds = array<i64: 2, 256>}, {transform_indices = @transform_2, window_bounds = array<i64: 1, 1, 1>}, {transform_indices = @transform_3, window_bounds = array<i64: 1, 1, 1>}]} {
    %c0_i32 = arith.constant 0 : i32
    %0 = arith.cmpi eq, %arg1, %c0_i32 : i32
    %1 = arith.extui %0 : i1 to i32
    %c0_i32_0 = arith.constant 0 : i32
    %2 = arith.cmpi ne, %1, %c0_i32_0 : i32
    scf.if %2 {
      %cst_25 = arith.constant 0.000000e+00 : f32
      %38 = vector.broadcast %cst_25 : f32 to vector<1x1x1xf32>
      %c0_26 = arith.constant 0 : index
      %c0_27 = arith.constant 0 : index
      %c0_28 = arith.constant 0 : index
      %39 = vector.load %arg4[%c0_26, %c0_27, %c0_28] : memref<1x1x1xf32, #tpu.memory_space<vmem>>, vector<1x1x1xf32>
      tpu.vector_store %arg4[%c0_26, %c0_27, %c0_28], %38 {strides = array<i32>} : memref<1x1x1xf32, #tpu.memory_space<vmem>>, vector<1x1x1xf32>,
      %cst_29 = arith.constant 0.000000e+00 : f32
      %40 = vector.broadcast %cst_29 : f32 to vector<1x1x1xf32>
      %c0_30 = arith.constant 0 : index
      %c0_31 = arith.constant 0 : index
      %c0_32 = arith.constant 0 : index
      %41 = vector.load %arg5[%c0_30, %c0_31, %c0_32] : memref<1x1x1xf32, #tpu.memory_space<vmem>>, vector<1x1x1xf32>
      tpu.vector_store %arg5[%c0_30, %c0_31, %c0_32], %40 {strides = array<i32>} : memref<1x1x1xf32, #tpu.memory_space<vmem>>, vector<1x1x1xf32>,
    } else {
    }
    %c0 = arith.constant 0 : index
    %c0_1 = arith.constant 0 : index
    %3 = vector.load %arg2[%c0, %c0_1] : memref<2x256xi32, #tpu.memory_space<vmem>>, vector<2x256xi32>
    %c0_2 = arith.constant 0 : index
    %c0_3 = arith.constant 0 : index
    %4 = vector.load %arg3[%c0_2, %c0_3] : memref<2x256xf32, #tpu.memory_space<vmem>>, vector<2x256xf32>
    %cst = arith.constant 0.000000e+00 : f32
    %5 = vector.broadcast %cst : f32 to vector<2x256xf32>
    %6 = arith.cmpf ogt, %4, %5 : vector<2x256xf32>
    %c-1_i32 = arith.constant -1 : i32
    %7 = vector.broadcast %c-1_i32 : i32 to vector<2x256xi32>
    %8 = arith.cmpi ne, %3, %7 : vector<2x256xi32>
    %cst_4 = arith.constant 1.000000e+00 : f32
    %cst_5 = arith.constant 0.000000e+00 : f32
    %9 = vector.broadcast %cst_4 : f32 to vector<2x256xf32>
    %10 = vector.broadcast %cst_5 : f32 to vector<2x256xf32>
    %11 = arith.select %8, %9, %10 : vector<2x256xi1>, vector<2x256xf32>
    %cst_6 = arith.constant 0.000000e+00 : f32
    %12 = vector.broadcast %cst_6 : f32 to vector<2x256xf32>
    %13 = arith.select %6, %11, %12 : vector<2x256xi1>, vector<2x256xf32>
    %c0_i32_7 = arith.constant 0 : i32
    %14 = vector.broadcast %c0_i32_7 : i32 to vector<2x256xi32>
    %15 = arith.cmpi sgt, %3, %14 : vector<2x256xi32>
    %cst_8 = arith.constant 0.000000e+00 : f32
    %16 = vector.broadcast %cst_8 : f32 to vector<2x256xf32>
    %17 = arith.select %15, %13, %16 : vector<2x256xi1>, vector<2x256xf32>
    %18 = vector.shape_cast %17 : vector<2x256xf32> to vector<1x2x256xf32>
    %cst_9 = arith.constant dense<0.000000e+00> : vector<1xf32>
    %19 = vector.multi_reduction <add>, %18, %cst_9 [1, 2] : vector<1x2x256xf32> to vector<1xf32>
    %20 = vector.shape_cast %19 : vector<1xf32> to vector<1x1x1xf32>
    %21 = vector.extract %20[0, 0, 0] : f32 from vector<1x1x1xf32>
    %c0_i32_10 = arith.constant 0 : i32
    %22 = vector.broadcast %c0_i32_10 : i32 to vector<2x256xi32>
    %23 = arith.cmpi eq, %3, %22 : vector<2x256xi32>
    %cst_11 = arith.constant 0.000000e+00 : f32
    %24 = vector.broadcast %cst_11 : f32 to vector<2x256xf32>
    %25 = arith.select %23, %13, %24 : vector<2x256xi1>, vector<2x256xf32>
    %26 = vector.shape_cast %25 : vector<2x256xf32> to vector<1x2x256xf32>
    %cst_12 = arith.constant dense<0.000000e+00> : vector<1xf32>
    %27 = vector.multi_reduction <add>, %26, %cst_12 [1, 2] : vector<1x2x256xf32> to vector<1xf32>
    %28 = vector.shape_cast %27 : vector<1xf32> to vector<1x1x1xf32>
    %29 = vector.extract %28[0, 0, 0] : f32 from vector<1x1x1xf32>
    %c0_13 = arith.constant 0 : index
    %c0_14 = arith.constant 0 : index
    %c0_15 = arith.constant 0 : index
    %30 = vector.load %arg4[%c0_13, %c0_14, %c0_15] : memref<1x1x1xf32, #tpu.memory_space<vmem>>, vector<1x1x1xf32>
    %31 = vector.broadcast %21 : f32 to vector<1x1x1xf32>
    %32 = arith.addf %30, %31 : vector<1x1x1xf32>
    %c0_16 = arith.constant 0 : index
    %c0_17 = arith.constant 0 : index
    %c0_18 = arith.constant 0 : index
    %33 = vector.load %arg4[%c0_16, %c0_17, %c0_18] : memref<1x1x1xf32, #tpu.memory_space<vmem>>, vector<1x1x1xf32>
    tpu.vector_store %arg4[%c0_16, %c0_17, %c0_18], %32 {strides = array<i32>} : memref<1x1x1xf32, #tpu.memory_space<vmem>>, vector<1x1x1xf32>,
    %c0_19 = arith.constant 0 : index
    %c0_20 = arith.constant 0 : index
    %c0_21 = arith.constant 0 : index
    %34 = vector.load %arg5[%c0_19, %c0_20, %c0_21] : memref<1x1x1xf32, #tpu.memory_space<vmem>>, vector<1x1x1xf32>
    %35 = vector.broadcast %29 : f32 to vector<1x1x1xf32>
    %36 = arith.addf %34, %35 : vector<1x1x1xf32>
    %c0_22 = arith.constant 0 : index
    %c0_23 = arith.constant 0 : index
    %c0_24 = arith.constant 0 : index
    %37 = vector.load %arg5[%c0_22, %c0_23, %c0_24] : memref<1x1x1xf32, #tpu.memory_space<vmem>>, vector<1x1x1xf32>
    tpu.vector_store %arg5[%c0_22, %c0_23, %c0_24], %36 {strides = array<i32>} : memref<1x1x1xf32, #tpu.memory_space<vmem>>, vector<1x1x1xf32>,
    return
  }
  func.func @transform_0(%arg0: i32, %arg1: i32) -> (i32, i32) {
    %c0_i32 = arith.constant 0 : i32
    return %arg0, %arg1 : i32, i32
  }
  func.func @transform_1(%arg0: i32, %arg1: i32) -> (i32, i32) {
    %c0_i32 = arith.constant 0 : i32
    return %arg0, %arg1 : i32, i32
  }
  func.func @transform_2(%arg0: i32, %arg1: i32) -> (i32, i32, i32) {
    %c0_i32 = arith.constant 0 : i32
    %c0_i32_0 = arith.constant 0 : i32
    %c0_i32_1 = arith.constant 0 : i32
    return %arg0, %c0_i32, %c0_i32_0 : i32, i32, i32
  }
  func.func @transform_3(%arg0: i32, %arg1: i32) -> (i32, i32, i32) {
    %c0_i32 = arith.constant 0 : i32
    %c0_i32_0 = arith.constant 0 : i32
    %c0_i32_1 = arith.constant 0 : i32
    return %arg0, %c0_i32, %c0_i32_0 : i32, i32, i32
  }
}

</mosaic_0001>

<llo_original>
// kernel: tpu_custom_call.1
$region0: #{tpu_custom_call.1}
  #allocation0 [shape = 'u32[]', space=smem, size = 0x4, offset = 0x4, fixed_abs, tag = 'smem constant byte address 0x4 - core index']
  #allocation1 [shape = 'u32[144,128]{1,0:T(1,128)}', space=vmem, size = 0x12000, scoped, tag = 'internal scratch']
  %s0 = inlined_call_operand.hbm [shape: s32[2,256], index: 0, kind: input, shape index: {}]
  %s1 = inlined_call_operand.hbm [shape: f32[2,256], index: 1, kind: input, shape index: {}]
  %s2 = inlined_call_operand.hbm [shape: f32[1,1,1], index: 2, kind: output, shape index: {0}]
  %s3 = inlined_call_operand.hbm [shape: f32[1,1,1], index: 3, kind: output, shape index: {1}]
  %4 = xla_tuple %s2, %s3
  %s5 = sld [smem:[#allocation0]]
  $region38: #{tpu_custom_call.1} parent=0
    _
  %s7 = ssub.s32 1, %s5
  %s8 = scalar_select 0, %s7, %s5
  $region1: #{tpu_custom_call.1} parent=0
    #allocation2 [shape = 'u8[2048]{0}', space=vmem, size = 0x800, scoped, tag = 'input window, operand 0, single buffered']
    #allocation3 [shape = 's32[1]{0}', space=sflag, size = 0x4, scoped, tag = 'scoped memory for tpu_custom_call.1']
    #allocation4 [shape = 's32[1]{0}', space=sflag, size = 0x4, scoped, tag = 'scoped memory for tpu_custom_call.1']
    #allocation5 [shape = 'u8[2048]{0}', space=vmem, size = 0x800, scoped, tag = 'input window, operand 1, single buffered']
    #allocation6 [shape = 's32[1]{0}', space=sflag, size = 0x4, scoped, tag = 'scoped memory for tpu_custom_call.1']
    #allocation7 [shape = 'u8[512]{0}', space=vmem, size = 0x400, scoped, tag = 'output window, operand 0, single buffered']
    #allocation8 [shape = 'u8[512]{0}', space=vmem, size = 0x400, scoped, tag = 'output window, operand 1, single buffered']
    #allocation9 [shape = 's32[1]{0}', space=sflag, size = 0x4, scoped, tag = 'scoped memory for tpu_custom_call.1']
    %9 = vsyncpa [#allocation3], 0
    %10 = vsyncpa [#allocation6], 0
    %11 = vsyncpa [#allocation4], 0
    %12 = vsyncpa [#allocation9], 0
    // Predicated region
    $region2: #{tpu_custom_call.1} parent=1 // pred_check
      _
    $region3: #{tpu_custom_call.1} parent=1 // pred_check_branch
      %14 = sbr.rel (0) target = $region5
    $region4: #{tpu_custom_call.1} parent=1 // pred_region
      %s16 = ssub.s32 64, 64
      %17 = vsyncadd [#allocation3], %s16
      %s19 = sshll.u32 [#allocation2], 4
      %s20 = int_to_ptr.vmem [resolvable:$true] %s19
      %22 = dma.hbm_to_vmem [thread:$0]  %s0, 64, %s20, [#allocation3]
    $region5: #{tpu_custom_call.1} parent=1 // pred_fallthru
      _
    // Predicated region
    $region6: #{tpu_custom_call.1} parent=1 // pred_check
      _
    $region7: #{tpu_custom_call.1} parent=1 // pred_check_branch
      %24 = sbr.rel (0) target = $region9
    $region8: #{tpu_custom_call.1} parent=1 // pred_region
      %s26 = ssub.s32 64, 64
      %27 = vsyncadd [#allocation6], %s26
      %s29 = sshll.u32 [#allocation5], 4
      %s30 = int_to_ptr.vmem [resolvable:$true] %s29
      %32 = dma.hbm_to_vmem [thread:$0]  %s1, 64, %s30, [#allocation6]
    $region9: #{tpu_custom_call.1} parent=1 // pred_fallthru
      _
    // Predicated region
    $region10: #{tpu_custom_call.1} parent=1 // pred_check
      _
    $region11: #{tpu_custom_call.1} parent=1 // pred_check_branch
      %34 = sbr.rel (0) target = $region13
    $region12: #{tpu_custom_call.1} parent=1 // pred_region
      %35 = dma.done [#allocation3], 64
    $region13: #{tpu_custom_call.1} parent=1 // pred_fallthru
      _
    // Predicated region
    $region14: #{tpu_custom_call.1} parent=1 // pred_check
      _
    $region15: #{tpu_custom_call.1} parent=1 // pred_check_branch
      %37 = sbr.rel (0) target = $region17
    $region16: #{tpu_custom_call.1} parent=1 // pred_region
      %38 = dma.done [#allocation6], 64
    $region17: #{tpu_custom_call.1} parent=1 // pred_fallthru
      _
    %p39 = scmp.eq.s32.totalorder 0, 0
    // Predicated region
    $region18: #{tpu_custom_call.1} parent=1 // pred_check
      %p40 = pneg %p39
    $region19: #{tpu_custom_call.1} parent=1 // pred_check_branch
      %42 = sbr.rel (%p40) target = $region21
    $region20: #{tpu_custom_call.1} parent=1 // pred_region
      %vm43 = vcmask 0
      %44 = vst.msk [vmem:[#allocation7] sm:$0x1] %vm43, 0.0
      %45 = vst.msk [vmem:[#allocation8] sm:$0x1] %vm43, 0.0
    $region21: #{tpu_custom_call.1} parent=1 // pred_fallthru
      _
    %v46 = vld [vmem:[#allocation2] sm:$0xf]
    %v47 = vld [vmem:[#allocation5] sm:$0xf]
    %vm48 = vcmp.gt.f32.partialorder %v47, 0.0
    %vm49 = vcmp.ne.s32.totalorder %v46, 4294967295
    %v50 = vsel %vm49, 1.0, 0.0
    %v51 = vsel %vm48, %v50, 0.0
    %vm52 = vcmp.gt.s32.totalorder %v46, 0
    %v53 = vsel %vm52, %v51, 0.0
    %v56 = vunpack.c.l.s4 1983009808
    %v57 = vunpack.c.0.s8 %v56
    %v58 = vlaneseq
    %v59 = vshrl.u32 %v58, 7
    %v60 = vsub.s32 %v57, %v59
    %v61 = vrot.slane %v53, %v60
    %v62 = vcombine.high %v61, %v61
    %vm65 = vcmask 1041408
    %v66 = vsel %vm65, %v61, 0.0
    %v67 = vsel %vm65, %v62, 0.0
    %v68 = vadd.f32 %v66, %v67
    %69 = vadd.xlane.f32.xlu0 %v68
    %v70 = vpop.xlane.xlu0 %69
    %v71 = vrot.slane %v70, 4
    %v72 = vadd.f32 %v70, %v71
    %v73 = vrot.slane %v72, 2
    %v74 = vadd.f32 %v72, %v73
    %v75 = vrot.slane %v74, 1
    %v76 = vadd.f32 %v74, %v75
    %s77 = vtos %v76
    %vm78 = vcmp.eq.s32.totalorder %v46, 0
    %v79 = vsel %vm78, %v51, 0.0
    %v82 = vunpack.c.l.s4 1983009808
    %v83 = vunpack.c.0.s8 %v82
    %v84 = vlaneseq
    %v85 = vshrl.u32 %v84, 7
    %v86 = vsub.s32 %v83, %v85
    %v87 = vrot.slane %v79, %v86
    %v88 = vcombine.high %v87, %v87
    %v91 = vsel %vm65, %v87, 0.0
    %v92 = vsel %vm65, %v88, 0.0
    %v93 = vadd.f32 %v91, %v92
    %94 = vadd.xlane.f32.xlu0 %v93
    %v95 = vpop.xlane.xlu0 %94
    %v96 = vrot.slane %v95, 4
    %v97 = vadd.f32 %v95, %v96
    %v98 = vrot.slane %v97, 2
    %v99 = vadd.f32 %v97, %v98
    %v100 = vrot.slane %v99, 1
    %v101 = vadd.f32 %v99, %v100
    %s102 = vtos %v101
    %v103 = vld [vmem:[#allocation7] sm:$0x1]
    %v104 = vstv %s77
    %v105 = vadd.f32 %v103, %v104
    %vm106 = vcmask 0
    %107 = vst.msk [vmem:[#allocation7] sm:$0x1] %vm106, %v105
    %v108 = vld [vmem:[#allocation8] sm:$0x1]
    %v109 = vstv %s102
    %v110 = vadd.f32 %v108, %v109
    %111 = vst.msk [vmem:[#allocation8] sm:$0x1] %vm106, %v110
    // Predicated region
    $region22: #{tpu_custom_call.1} parent=1 // pred_check
      _
    $region23: #{tpu_custom_call.1} parent=1 // pred_check_branch
      %113 = sbr.rel (0) target = $region25
    $region24: #{tpu_custom_call.1} parent=1 // pred_region
      %s115 = ssub.s32 16, 16
      %116 = vsyncadd [#allocation4], %s115
      %s118 = sshll.u32 [#allocation7], 4
      %s119 = int_to_ptr.vmem [resolvable:$true] %s118
      %121 = dma.vmem_to_hbm [thread:$0]  %s119, 16, %s2, [#allocation4]
    $region25: #{tpu_custom_call.1} parent=1 // pred_fallthru
      _
    // Predicated region
    $region26: #{tpu_custom_call.1} parent=1 // pred_check
      _
    $region27: #{tpu_custom_call.1} parent=1 // pred_check_branch
      %123 = sbr.rel (0) target = $region29
    $region28: #{tpu_custom_call.1} parent=1 // pred_region
      %s125 = ssub.s32 16, 16
      %126 = vsyncadd [#allocation9], %s125
      %s128 = sshll.u32 [#allocation8], 4
      %s129 = int_to_ptr.vmem [resolvable:$true] %s128
      %131 = dma.vmem_to_hbm [thread:$0]  %s129, 16, %s3, [#allocation9]
    $region29: #{tpu_custom_call.1} parent=1 // pred_fallthru
      _
    // Predicated region
    $region30: #{tpu_custom_call.1} parent=1 // pred_check
      _
    $region31: #{tpu_custom_call.1} parent=1 // pred_check_branch
      %133 = sbr.rel (0) target = $region33
    $region32: #{tpu_custom_call.1} parent=1 // pred_region
      %134 = dma.done [#allocation4], 16
    $region33: #{tpu_custom_call.1} parent=1 // pred_fallthru
      _
    // Predicated region
    $region34: #{tpu_custom_call.1} parent=1 // pred_check
      _
    $region35: #{tpu_custom_call.1} parent=1 // pred_check_branch
      %136 = sbr.rel (0) target = $region37
    $region36: #{tpu_custom_call.1} parent=1 // pred_region
      %137 = dma.done [#allocation9], 16
    $region37: #{tpu_custom_call.1} parent=1 // pred_fallthru
      _
    %138 = vsyncpa [#allocation3], 1
    %139 = vsyncpa [#allocation6], 1
    %140 = vsyncpa [#allocation4], 1
    %141 = vsyncpa [#allocation9], 1

</llo_original>
